<compile_context>
chip_gen: v5e
topology: v5e:2x2
jax: 0.10.0
libtpu: 0.0.40
codegen_flags: <defaults>
</compile_context>

<pallas_src>
import functools

import jax
import jax.numpy as jnp
from jax.experimental import pallas as pl
from jax.experimental.pallas import tpu as pltpu

BN_EPS = 1e-5
NEG_BIG = -1e30


# ----------------------------------------------------------------------------
# Generation-aware scoped VMEM limit and tile picking.
# ----------------------------------------------------------------------------
def _vmem_limit_bytes():
    """~75% of physical VMEM: 96 MiB on v5e/v6e (128 MiB), 48 MiB on v7x (64 MiB)."""
    cap = None
    try:
        cap = getattr(pltpu.get_tpu_info(), "vmem_capacity_bytes", None)
    except Exception:
        cap = None
    if not cap:
        cap = 64 * 1024 * 1024  # conservative fallback (v7x per-TC physical)
    return int(cap) * 3 // 4


def _pick_tile(n, target, *, min_tiles=1):
    """Largest t dividing n with t <= target, t % 8 == 0 (or t == n), n//t >= min_tiles."""
    upper = min(target, n)
    if min_tiles > 1 and n // min_tiles >= 8:
        upper = min(upper, n // min_tiles)
    for t in range(upper, 0, -1):
        if n % t == 0 and (t % 8 == 0 or t == n):
            return t
    return n


def _epilogue(h, mode):
    if mode == "relu":
        # BN already folded into W/bias; dropout(p=0.5) = identity (eval).
        return jnp.maximum(h, 0.0)
    if mode == "logsoftmax":
        # Padded class columns carry bias = -1e30 (f32) -> exp underflows to 0,
        # so the 128-lane reduction equals the reduction over the real C classes.
        m = jnp.max(h, axis=-1, keepdims=True)
        s = h - m
        lse = jnp.log(jnp.sum(jnp.exp(s), axis=-1, keepdims=True))
        return s - lse
    return h


# ----------------------------------------------------------------------------
# Kernel 1: feature transform  XW = X @ W   (computed exactly once per layer)
# ----------------------------------------------------------------------------
def _xw_kernel(x_ref, w_ref, o_ref):
    o_ref[...] = jnp.dot(x_ref[...], w_ref[...],
                         preferred_element_type=jnp.float32).astype(o_ref.dtype)


def feature_transform(x, w, *, tile_target, out_dtype, vmem_limit):
    N, F = x.shape
    H = w.shape[1]
    tm = _pick_tile(N, tile_target)
    assert N % tm == 0  # TODO(synk): ragged row-tile masking for general N
    return pl.pallas_call(
        _xw_kernel,
        out_shape=jax.ShapeDtypeStruct((N, H), out_dtype),
        grid_spec=pltpu.PrefetchScalarGridSpec(
            num_scalar_prefetch=0,
            grid=(N // tm,),
            in_specs=[
                pl.BlockSpec((tm, F), lambda i: (i, 0)),   # X row tile
                pl.BlockSpec((F, H), lambda i: (0, 0)),    # full W (small, resident)
            ],
            out_specs=pl.BlockSpec((tm, H), lambda i: (i, 0)),
        ),
        compiler_params=pltpu.CompilerParams(
            dimension_semantics=("parallel",),
            vmem_limit_bytes=vmem_limit),
    )(x, w)


# ----------------------------------------------------------------------------
# Kernel 2a: resident-XW aggregation  out[tile] = A[tile,:] @ XW + bias, fused
#   XW has a constant full-array BlockSpec -> DMA'd once, kept resident.
# ----------------------------------------------------------------------------
def _agg_resident_kernel(a_ref, xw_ref, b_ref, o_ref, *, mode):
    h = jnp.dot(a_ref[...], xw_ref[...], preferred_element_type=jnp.float32)
    h = h + b_ref[...]                                     # (1, H) broadcast, f32
    o_ref[...] = _epilogue(h, mode).astype(o_ref.dtype)


# ----------------------------------------------------------------------------
# Kernel 2b: k-tiled fallback (XW too large for residency); f32 accumulator
#   resident across the contraction axis (last, "arbitrary").
# ----------------------------------------------------------------------------
def _agg_ktiled_kernel(a_ref, xw_ref, b_ref, o_ref, acc_ref, *, mode):
    k = pl.program_id(1)

    @pl.when(k == 0)
    def _():
        acc_ref[...] = jnp.zeros_like(acc_ref)

    acc_ref[...] += jnp.dot(a_ref[...], xw_ref[...],
                            preferred_element_type=jnp.float32)

    @pl.when(k == pl.num_programs(1) - 1)
    def _():
        h = acc_ref[...] + b_ref[...]
        o_ref[...] = _epilogue(h, mode).astype(o_ref.dtype)


def aggregate(a_cd, xw, bias, *, mode, tile_target, out_dtype, vmem_limit):
    N = a_cd.shape[0]
    H = xw.shape[1]
    # Keep >= 2 row tiles so the "parallel" axis can shard across v7x's two TCs.
    tm = _pick_tile(N, tile_target, min_tiles=2)
    assert N % tm == 0  # TODO(synk): ragged tiles for general N

    bias_row = bias.reshape(1, H).astype(jnp.float32)
    xw_cd = xw.astype(a_cd.dtype)
    in_sz = jnp.dtype(a_cd.dtype).itemsize
    out_sz = jnp.dtype(out_dtype).itemsize

    # Conservative resident-path VMEM estimate (double-buffer everything).
    resident_bytes = (2 * tm * N * in_sz        # A row tile, double-buffered
                      + 2 * N * H * in_sz       # full XW (constant block index)
                      + 2 * tm * H * out_sz     # output tile
                      + 2 * H * 4)              # bias row
    if resident_bytes <= int(vmem_limit * 0.9):
        # Single grid axis, no contraction loop, no accumulator: XW loaded once.
        return pl.pallas_call(
            functools.partial(_agg_resident_kernel, mode=mode),
            out_shape=jax.ShapeDtypeStruct((N, H), out_dtype),
            grid_spec=pltpu.PrefetchScalarGridSpec(
                num_scalar_prefetch=0,
                grid=(N // tm,),
                in_specs=[
                    pl.BlockSpec((tm, N), lambda i: (i, 0)),   # A row tile (streamed)
                    pl.BlockSpec((N, H), lambda i: (0, 0)),    # full XW (resident)
                    pl.BlockSpec((1, H), lambda i: (0, 0)),    # fused bias
                ],
                out_specs=pl.BlockSpec((tm, H), lambda i: (i, 0)),
            ),
            compiler_params=pltpu.CompilerParams(
                dimension_semantics=("parallel",),
                vmem_limit_bytes=vmem_limit),
        )(a_cd, xw_cd, bias_row)

    # Fallback: k-tiled contraction with large tiles (XW re-stream overhead ~ H/tm).
    tk = _pick_tile(N, tile_target)
    assert N % tk == 0  # TODO(synk): ragged tiles for general N
    return pl.pallas_call(
        functools.partial(_agg_ktiled_kernel, mode=mode),
        out_shape=jax.ShapeDtypeStruct((N, H), out_dtype),
        grid_spec=pltpu.PrefetchScalarGridSpec(
            num_scalar_prefetch=0,
            grid=(N // tm, N // tk),
            in_specs=[
                pl.BlockSpec((tm, tk), lambda i, k: (i, k)),   # A tile (streamed)
                pl.BlockSpec((tk, H), lambda i, k: (k, 0)),    # XW k-slab
                pl.BlockSpec((1, H), lambda i, k: (0, 0)),     # fused bias
            ],
            out_specs=pl.BlockSpec((tm, H), lambda i, k: (i, 0)),
            scratch_shapes=[pltpu.VMEM((tm, H), jnp.float32)],  # f32 accumulator
        ),
        compiler_params=pltpu.CompilerParams(
            dimension_semantics=("parallel", "arbitrary"),
            vmem_limit_bytes=vmem_limit),
    )(a_cd, xw_cd, bias_row)


def gcn_layer(a_cd, x, w, bias, *, mode, compute_dtype, out_dtype=None,
              agg_tile_target=512, ft_tile_target=2048, vmem_limit=None):
    """One GCN layer: A_norm @ (x @ w) + bias, fused with relu or log_softmax."""
    cd = compute_dtype
    out_dtype = cd if out_dtype is None else out_dtype
    vmem_limit = _vmem_limit_bytes() if vmem_limit is None else vmem_limit
    xw = feature_transform(x.astype(cd), w.astype(cd),
                           tile_target=ft_tile_target, out_dtype=cd,
                           vmem_limit=vmem_limit)
    return aggregate(a_cd, xw, bias, mode=mode, tile_target=agg_tile_target,
                     out_dtype=out_dtype, vmem_limit=vmem_limit)


# ----------------------------------------------------------------------------
# ONINorm (T=4, norm_groups=1) — weight preprocessing (plain JAX, tiny compute).
# ----------------------------------------------------------------------------
def oni_norm(weight, T=4, eps=1e-5):
    f_in, h = weight.shape
    Z = weight.reshape(1, f_in, h)
    Zc = Z - Z.mean(axis=-1, keepdims=True)
    S = Zc @ jnp.swapaxes(Zc, 1, 2)                       # (1, f_in, f_in)
    eye = jnp.eye(f_in, dtype=weight.dtype)[None]
    S = S + eps * eye
    norm_S = jnp.sqrt(jnp.sum(S * S, axis=(1, 2), keepdims=True))
    S = S / norm_S
    B = eye
    for _ in range(T):
        B3 = B @ B @ B
        B = 1.5 * B - 0.5 * (B3 @ S)                      # baddbmm(1.5, B, -0.5, B^3, S)
    W = (B @ Zc) / jnp.sqrt(norm_S)
    return W.reshape(f_in, h)


# ----------------------------------------------------------------------------
# Graph normalization: dense D^-1/2 (A + I) D^-1/2 (plain JAX, one-time glue).
# ----------------------------------------------------------------------------
def dense_gcn_norm(src, dst, num_nodes):
    A = jnp.zeros((num_nodes, num_nodes), jnp.float32)
    A = A.at[src, dst].set(1.0)
    A = jnp.maximum(A, A.T)                               # undirected
    A = jnp.maximum(A, jnp.eye(num_nodes, dtype=jnp.float32))   # self loops
    deg = A.sum(axis=1)
    dinv = jax.lax.rsqrt(deg)
    return dinv[:, None] * A * dinv[None, :]


# ----------------------------------------------------------------------------
# Parameter preprocessing: ONI + eval-mode BatchNorm folding (plain JAX).
# ----------------------------------------------------------------------------
def prepare_params(p):
    s0 = p["g0"] * jax.lax.rsqrt(p["var0"] + BN_EPS)
    s1 = p["g1"] * jax.lax.rsqrt(p["var1"] + BN_EPS)
    return {
        "w0": p["w0"] * s0[None, :],
        "b0": (p["b0"] - p["mu0"]) * s0 + p["bt0"],
        "w1": oni_norm(p["w1"], T=4) * s1[None, :],       # GCNConv1: ONI weight, no bias
        "b1": (-p["mu1"]) * s1 + p["bt1"],
        "w2": p["w2"],
        "b2": p["b2"],
    }


# ----------------------------------------------------------------------------
# Full GCNNet forward using the Pallas layer kernels.
# ----------------------------------------------------------------------------
def gcnnet_forward(a_norm, x, prep, *, compute_dtype=jnp.bfloat16,
                   agg_tile_target=512, ft_tile_target=2048):
    cd = compute_dtype
    a = a_norm.astype(cd)
    vmem_limit = _vmem_limit_bytes()
    common = dict(compute_dtype=cd, agg_tile_target=agg_tile_target,
                  ft_tile_target=ft_tile_target, vmem_limit=vmem_limit)

    # Layer 0: GCNConv + folded BN + ReLU (dropout = identity, inference).
    h = gcn_layer(a, x, prep["w0"], prep["b0"], mode="relu", **common)
    # Layer 1: GCNConv1 (ONI weight, bias=False) + folded BN + ReLU.
    h = gcn_layer(a, h, prep["w1"], prep["b1"], mode="relu", **common)
    # Layer 2: GCNConv + log_softmax. Pad classes to a lane-dense 128-wide
    # output (padded columns get bias -1e30 so the softmax is unaffected).
    Hin, C = prep["w2"].shape
    Cp = max(128, ((C + 127) // 128) * 128)
    w2p = jnp.zeros((Hin, Cp), jnp.float32).at[:, :C].set(prep["w2"])
    b2p = jnp.full((Cp,), NEG_BIG, jnp.float32).at[:C].set(prep["b2"])
    out = gcn_layer(a, h, w2p, b2p, mode="logsoftmax",
                    out_dtype=jnp.float32, **common)
    return out[:, :C]


# ----------------------------------------------------------------------------
# References for verification.
# ----------------------------------------------------------------------------
def gcnnet_ref(a_norm, x, prep, compute_dtype=jnp.bfloat16):
    """Pure-JAX reference mirroring the kernel pipeline (folded BN, bf16 MXU operands)."""
    cd = compute_dtype
    a = a_norm.astype(cd)

    def xw_(xin, w):
        return jnp.dot(xin.astype(cd), w.astype(cd),
                       preferred_element_type=jnp.float32).astype(cd)

    def agg(xw, b):
        return jnp.dot(a, xw, preferred_element_type=jnp.float32) + b.astype(jnp.float32)

    h = jnp.maximum(agg(xw_(x, prep["w0"]), prep["b0"]), 0.0).astype(cd)
    h = jnp.maximum(agg(xw_(h, prep["w1"]), prep["b1"]), 0.0).astype(cd)
    logits = agg(xw_(h, prep["w2"]), prep["b2"])
    return jax.nn.log_softmax(logits, axis=1)


def gcnnet_ref_f32(a_norm, x, params):
    """Faithful f32 reference of the original module (explicit eval-mode BN)."""
    p = params
    h = a_norm @ (x @ p["w0"]) + p["b0"]
    h = (h - p["mu0"]) / jnp.sqrt(p["var0"] + BN_EPS) * p["g0"] + p["bt0"]
    h = jnp.maximum(h, 0.0)
    h = a_norm @ (h @ oni_norm(p["w1"], T=4))
    h = (h - p["mu1"]) / jnp.sqrt(p["var1"] + BN_EPS) * p["g1"] + p["bt1"]
    h = jnp.maximum(h, 0.0)
    h = a_norm @ (h @ p["w2"]) + p["b2"]
    return jax.nn.log_softmax(h, axis=1)


def glorot(key, fan_in, fan_out):
    a = jnp.sqrt(6.0 / (fan_in + fan_out))
    return jax.random.uniform(key, (fan_in, fan_out), jnp.float32, -a, a)


if __name__ == "__main__":
    # Small shapes consistent with the module: N nodes, F_in node features,
    # hidden units (lane-aligned 128), C classes.
    N, F_IN, HIDDEN, C = 256, 32, 128, 8
    NUM_EDGES = 1024

    key = jax.random.PRNGKey(0)
    ks = jax.random.split(key, 16)

    # Node features and a random undirected graph.
    x = jax.random.normal(ks[0], (N, F_IN), jnp.float32)
    src = jax.random.randint(ks[1], (NUM_EDGES,), 0, N)
    dst = jax.random.randint(ks[2], (NUM_EDGES,), 0, N)
    a_norm = dense_gcn_norm(src, dst, N)

    params = {
        # GCNConv(F_IN, HIDDEN)
        "w0": glorot(ks[3], F_IN, HIDDEN),
        "b0": jnp.zeros((HIDDEN,), jnp.float32),
        # BatchNorm1d(HIDDEN) #0 — deterministic non-trivial running stats
        "g0": 1.0 + 0.1 * jax.random.normal(ks[4], (HIDDEN,), jnp.float32),
        "bt0": 0.1 * jax.random.normal(ks[5], (HIDDEN,), jnp.float32),
        "mu0": 0.1 * jax.random.normal(ks[6], (HIDDEN,), jnp.float32),
        "var0": 1.0 + 0.1 * jax.random.uniform(ks[7], (HIDDEN,), jnp.float32),
        # GCNConv1(HIDDEN, HIDDEN), bias=False, ONI weight normalization
        "w1": glorot(ks[8], HIDDEN, HIDDEN),
        # BatchNorm1d(HIDDEN) #1
        "g1": 1.0 + 0.1 * jax.random.normal(ks[9], (HIDDEN,), jnp.float32),
        "bt1": 0.1 * jax.random.normal(ks[10], (HIDDEN,), jnp.float32),
        "mu1": 0.1 * jax.random.normal(ks[11], (HIDDEN,), jnp.float32),
        "var1": 1.0 + 0.1 * jax.random.uniform(ks[12], (HIDDEN,), jnp.float32),
        # GCNConv(HIDDEN, C)
        "w2": glorot(ks[13], HIDDEN, C),
        "b2": jnp.zeros((C,), jnp.float32),
    }

    prep = prepare_params(params)

    out = gcnnet_forward(a_norm, x, prep, compute_dtype=jnp.bfloat16)
    out = jax.block_until_ready(out)
    assert out.shape == (N, C)

    # Tight check against a reference that mirrors the kernel pipeline exactly.
    ref = gcnnet_ref(a_norm, x, prep, compute_dtype=jnp.bfloat16)
    assert jnp.allclose(out, ref, atol=1e-3, rtol=1e-3), \
        float(jnp.max(jnp.abs(out - ref)))

    # Loose semantic check against the faithful f32 (unfolded-BN) reference;
    # drift is only bf16 operand quantization.
    ref32 = gcnnet_ref_f32(a_norm, x, params)
    assert jnp.allclose(out, ref32, atol=1e-1, rtol=1e-1), \
        float(jnp.max(jnp.abs(out - ref32)))

    print("KERNEL_OK")
</pallas_src>

<mosaic_0001>
module attributes {stable_mosaic.version = 11 : i64} {
  func.func @_xw_kernel(%arg0: i32, %arg1: memref<256x32xbf16, #tpu.memory_space<vmem>>, %arg2: memref<32x128xbf16, #tpu.memory_space<vmem>>, %arg3: memref<256x128xbf16, #tpu.memory_space<vmem>>) attributes {dimension_semantics = [#tpu.dimension_semantics<parallel>], iteration_bounds = array<i64: 1>, scalar_prefetch = 0 : i64, scratch_operands = 0 : i64, tpu.core_type = #tpu.core_type<tc>, window_params = [{transform_indices = @transform_0, window_bounds = array<i64: 256, 32>}, {pipeline_mode = #tpu.pipeline_mode<synchronous>, transform_indices = @transform_1, window_bounds = array<i64: 32, 128>}, {transform_indices = @transform_2, window_bounds = array<i64: 256, 128>}]} {
    %c0 = arith.constant 0 : index
    %c0_0 = arith.constant 0 : index
    %0 = vector.load %arg1[%c0, %c0_0] : memref<256x32xbf16, #tpu.memory_space<vmem>>, vector<256x32xbf16>
    %c0_1 = arith.constant 0 : index
    %c0_2 = arith.constant 0 : index
    %1 = vector.load %arg2[%c0_1, %c0_2] : memref<32x128xbf16, #tpu.memory_space<vmem>>, vector<32x128xbf16>
    %cst = arith.constant dense<0.000000e+00> : vector<256x128xf32>
    %2 = tpu.matmul %0, %1, %cst {dimension_numbers = #tpu.dot_dimension_numbers<[1], [0], [0], [1], [0, 0, 1, 1], [], []>} : vector<256x32xbf16>, vector<32x128xbf16>, vector<256x128xf32> -> vector<256x128xf32>
    %3 = arith.truncf %2 : vector<256x128xf32> to vector<256x128xbf16>
    %c0_3 = arith.constant 0 : index
    %c0_4 = arith.constant 0 : index
    %4 = vector.load %arg3[%c0_3, %c0_4] : memref<256x128xbf16, #tpu.memory_space<vmem>>, vector<256x128xbf16>
    tpu.vector_store %arg3[%c0_3, %c0_4], %3 {strides = array<i32>} : memref<256x128xbf16, #tpu.memory_space<vmem>>, vector<256x128xbf16>,
    return
  }
  func.func @transform_0(%arg0: i32) -> (i32, i32) {
    %c0_i32 = arith.constant 0 : i32
    %c0_i32_0 = arith.constant 0 : i32
    return %arg0, %c0_i32 : i32, i32
  }
  func.func @transform_1(%arg0: i32) -> (i32, i32) {
    %c0_i32 = arith.constant 0 : i32
    %c0_i32_0 = arith.constant 0 : i32
    %c0_i32_1 = arith.constant 0 : i32
    return %c0_i32, %c0_i32_0 : i32, i32
  }
  func.func @transform_2(%arg0: i32) -> (i32, i32) {
    %c0_i32 = arith.constant 0 : i32
    %c0_i32_0 = arith.constant 0 : i32
    return %arg0, %c0_i32 : i32, i32
  }
}

</mosaic_0001>

<llo_original>
// kernel: tpu_custom_call.1
$region0: #{tpu_custom_call.1}
  #allocation0 [shape = 'u32[]', space=smem, size = 0x4, offset = 0x4, fixed_abs, tag = 'smem constant byte address 0x4 - core index']
  #allocation1 [shape = 'u32[72,128]{1,0:T(1,128)}', space=vmem, size = 0x9000, scoped, tag = 'internal scratch']
  %s0 = inlined_call_operand.vmem [shape: bf16[256,32], index: 0, kind: input, shape index: {}]
  %s1 = inlined_call_operand.vmem [shape: bf16[32,128], index: 1, kind: input, shape index: {}]
  %s2 = inlined_call_operand.hbm [shape: bf16[256,128], index: 2, kind: output, shape index: {}]
  %s3 = sld [smem:[#allocation0]]
  $region18: #{tpu_custom_call.1} parent=0
    _
  %s5 = ssub.s32 1, %s3
  %s6 = scalar_select 0, %s5, %s3
  $region1: #{tpu_custom_call.1} parent=0
    #allocation2 [shape = 'u8[65536]{0}', space=vmem, size = 0x10000, scoped, tag = 'output window, operand 0, single buffered']
    #allocation3 [shape = 's32[1]{0}', space=sflag, size = 0x4, scoped, tag = 'scoped memory for tpu_custom_call.1']
    %7 = vsyncpa [#allocation3], 0
    // Predicated region
    $region2: #{tpu_custom_call.1} parent=1 // pred_check
      _
    $region3: #{tpu_custom_call.1} parent=1 // pred_check_branch
      %9 = sbr.rel (0) target = $region5
    $region4: #{tpu_custom_call.1} parent=1 // pred_region
      _
    $region5: #{tpu_custom_call.1} parent=1 // pred_fallthru
      _
    // Predicated region
    $region6: #{tpu_custom_call.1} parent=1 // pred_check
      _
    $region7: #{tpu_custom_call.1} parent=1 // pred_check_branch
      %11 = sbr.rel (0) target = $region9
    $region8: #{tpu_custom_call.1} parent=1 // pred_region
      _
    $region9: #{tpu_custom_call.1} parent=1 // pred_fallthru
      _
    %v13 = vld [vmem:[%s0] sm:$0xf]
    %v14 = vld [vmem:[%s0 + $0x4] sm:$0xf]
    %v15 = vld [vmem:[%s0 + $0x8] sm:$0xf]
    %v16 = vld [vmem:[%s0 + $0xc] sm:$0xf]
    %v17 = vld [vmem:[%s0 + $0x10] sm:$0xf]
    %v18 = vld [vmem:[%s0 + $0x14] sm:$0xf]
    %v19 = vld [vmem:[%s0 + $0x18] sm:$0xf]
    %v20 = vld [vmem:[%s0 + $0x1c] sm:$0xf]
    %v21 = vld [vmem:[%s0 + $0x20] sm:$0xf]
    %v22 = vld [vmem:[%s0 + $0x24] sm:$0xf]
    %v23 = vld [vmem:[%s0 + $0x28] sm:$0xf]
    %v24 = vld [vmem:[%s0 + $0x2c] sm:$0xf]
    %v25 = vld [vmem:[%s0 + $0x30] sm:$0xf]
    %v26 = vld [vmem:[%s0 + $0x34] sm:$0xf]
    %v27 = vld [vmem:[%s0 + $0x38] sm:$0xf]
    %v28 = vld [vmem:[%s0 + $0x3c] sm:$0xf]
    %v29 = vld [vmem:[%s0 + $0x40] sm:$0xf]
    %v30 = vld [vmem:[%s0 + $0x44] sm:$0xf]
    %v31 = vld [vmem:[%s0 + $0x48] sm:$0xf]
    %v32 = vld [vmem:[%s0 + $0x4c] sm:$0xf]
    %v33 = vld [vmem:[%s0 + $0x50] sm:$0xf]
    %v34 = vld [vmem:[%s0 + $0x54] sm:$0xf]
    %v35 = vld [vmem:[%s0 + $0x58] sm:$0xf]
    %v36 = vld [vmem:[%s0 + $0x5c] sm:$0xf]
    %v37 = vld [vmem:[%s0 + $0x60] sm:$0xf]
    %v38 = vld [vmem:[%s0 + $0x64] sm:$0xf]
    %v39 = vld [vmem:[%s0 + $0x68] sm:$0xf]
    %v40 = vld [vmem:[%s0 + $0x6c] sm:$0xf]
    %v41 = vld [vmem:[%s0 + $0x70] sm:$0xf]
    %v42 = vld [vmem:[%s0 + $0x74] sm:$0xf]
    %v43 = vld [vmem:[%s0 + $0x78] sm:$0xf]
    %v44 = vld [vmem:[%s0 + $0x7c] sm:$0xf]
    %v45 = vld [vmem:[%s1] sm:$0xf]
    %v46 = vld [vmem:[%s1 + $0x4] sm:$0xf]
    %v47 = vld [vmem:[%s1 + $0x8] sm:$0xf]
    %v48 = vld [vmem:[%s1 + $0xc] sm:$0xf]
    %v81 = vunpack.c.l.b16 %v13
    %v82 = vunpack.c.l.b16 %v14
    %v83 = vunpack.c.l.b16 %v15
    %v84 = vunpack.c.l.b16 %v16
    %v85 = vunpack.c.l.b16 %v17
    %v86 = vunpack.c.l.b16 %v18
    %v87 = vunpack.c.l.b16 %v19
    %v88 = vunpack.c.l.b16 %v20
    %v89 = vunpack.c.l.b16 %v21
    %v90 = vunpack.c.l.b16 %v22
    %v91 = vunpack.c.l.b16 %v23
    %v92 = vunpack.c.l.b16 %v24
    %v93 = vunpack.c.l.b16 %v25
    %v94 = vunpack.c.l.b16 %v26
    %v95 = vunpack.c.l.b16 %v27
    %v96 = vunpack.c.l.b16 %v28
    %v97 = vunpack.c.l.b16 %v29
    %v98 = vunpack.c.l.b16 %v30
    %v99 = vunpack.c.l.b16 %v31
    %v100 = vunpack.c.l.b16 %v32
    %v101 = vunpack.c.l.b16 %v33
    %v102 = vunpack.c.l.b16 %v34
    %v103 = vunpack.c.l.b16 %v35
    %v104 = vunpack.c.l.b16 %v36
    %v105 = vunpack.c.l.b16 %v37
    %v106 = vunpack.c.l.b16 %v38
    %v107 = vunpack.c.l.b16 %v39
    %v108 = vunpack.c.l.b16 %v40
    %v109 = vunpack.c.l.b16 %v41
    %v110 = vunpack.c.l.b16 %v42
    %v111 = vunpack.c.l.b16 %v43
    %v112 = vunpack.c.l.b16 %v44
    %v113 = vpack.c.b16 %v82, %v81
    %v114 = vpack.c.b16 %v84, %v83
    %v115 = vpack.c.b16 %v86, %v85
    %v116 = vpack.c.b16 %v88, %v87
    %v117 = vpack.c.b16 %v90, %v89
    %v118 = vpack.c.b16 %v92, %v91
    %v119 = vpack.c.b16 %v94, %v93
    %v120 = vpack.c.b16 %v96, %v95
    %v121 = vpack.c.b16 %v98, %v97
    %v122 = vpack.c.b16 %v100, %v99
    %v123 = vpack.c.b16 %v102, %v101
    %v124 = vpack.c.b16 %v104, %v103
    %v125 = vpack.c.b16 %v106, %v105
    %v126 = vpack.c.b16 %v108, %v107
    %v127 = vpack.c.b16 %v110, %v109
    %v128 = vpack.c.b16 %v112, %v111
    %v133 = vunpack.c.l.b16 %v45
    %v134 = vunpack.c.l.b16 %v46
    %v135 = vunpack.c.l.b16 %v47
    %v136 = vunpack.c.l.b16 %v48
    %v137 = vpack.c.b16 %v134, %v133
    %v138 = vpack.c.b16 %v136, %v135
    %vm141 = vcmask 261120
    %v143 = vsel %vm141, %v113, 0
    %v146 = vsel %vm141, %v114, 0
    %v149 = vsel %vm141, %v115, 0
    %v152 = vsel %vm141, %v116, 0
    %v155 = vsel %vm141, %v117, 0
    %v158 = vsel %vm141, %v118, 0
    %v161 = vsel %vm141, %v119, 0
    %v164 = vsel %vm141, %v120, 0
    %v167 = vsel %vm141, %v121, 0
    %v170 = vsel %vm141, %v122, 0
    %v173 = vsel %vm141, %v123, 0
    %v176 = vsel %vm141, %v124, 0
    %v179 = vsel %vm141, %v125, 0
    %v182 = vsel %vm141, %v126, 0
    %v185 = vsel %vm141, %v127, 0
    %v188 = vsel %vm141, %v128, 0
    %190 = vmatpush.bf16.msra.mxu0 0
    %191 = vmatpush.bf16.msra.mxu0 0
    %192 = vmatpush.bf16.msra.mxu0 0
    %193 = vmatpush.bf16.msra.mxu0 0
    %194 = vmatpush.bf16.msra.mxu0 0
    %195 = vmatpush.bf16.msra.mxu0 0
    %196 = vmatpush.bf16.msra.mxu0 %v138
    %197 = vmatpush.bf16.msra.mxu0 %v137
    %198 = vmatmul.bf16.gmra.mxu0 %v143
    %v199 = vpop.f32.mrf.mxu0
    %v200 = vadd.f32 0.0, %v199
    %v201 = vpop.f32.mrf.mxu0
    %v202 = vadd.f32 0.0, %v201
    %203 = vmatmul.bf16.gmra.mxu0 %v146
    %v204 = vpop.f32.mrf.mxu0
    %v205 = vadd.f32 0.0, %v204
    %v206 = vpop.f32.mrf.mxu0
    %v207 = vadd.f32 0.0, %v206
    %208 = vmatmul.bf16.gmra.mxu0 %v149
    %v209 = vpop.f32.mrf.mxu0
    %v210 = vadd.f32 0.0, %v209
    %v211 = vpop.f32.mrf.mxu0
    %v212 = vadd.f32 0.0, %v211
    %213 = vmatmul.bf16.gmra.mxu0 %v152
    %v214 = vpop.f32.mrf.mxu0
    %v215 = vadd.f32 0.0, %v214
    %v216 = vpop.f32.mrf.mxu0
    %v217 = vadd.f32 0.0, %v216
    %218 = vmatmul.bf16.gmra.mxu0 %v155
    %v219 = vpop.f32.mrf.mxu0
    %v220 = vadd.f32 0.0, %v219
    %v221 = vpop.f32.mrf.mxu0
    %v222 = vadd.f32 0.0, %v221
    %223 = vmatmul.bf16.gmra.mxu0 %v158
    %v224 = vpop.f32.mrf.mxu0
    %v225 = vadd.f32 0.0, %v224
    %v226 = vpop.f32.mrf.mxu0
    %v227 = vadd.f32 0.0, %v226
    %228 = vmatmul.bf16.gmra.mxu0 %v161
    %v229 = vpop.f32.mrf.mxu0
    %v230 = vadd.f32 0.0, %v229
    %v231 = vpop.f32.mrf.mxu0
    %v232 = vadd.f32 0.0, %v231
    %233 = vmatmul.bf16.gmra.mxu0 %v164
    %v234 = vpop.f32.mrf.mxu0
    %v235 = vadd.f32 0.0, %v234
    %v236 = vpop.f32.mrf.mxu0
    %v237 = vadd.f32 0.0, %v236
    %238 = vmatmul.bf16.gmra.mxu0 %v167
    %v239 = vpop.f32.mrf.mxu0
    %v240 = vadd.f32 0.0, %v239
    %v241 = vpop.f32.mrf.mxu0
    %v242 = vadd.f32 0.0, %v241
    %243 = vmatmul.bf16.gmra.mxu0 %v170
    %v244 = vpop.f32.mrf.mxu0
    %v245 = vadd.f32 0.0, %v244
    %v246 = vpop.f32.mrf.mxu0
    %v247 = vadd.f32 0.0, %v246
    %248 = vmatmul.bf16.gmra.mxu0 %v173
    %v249 = vpop.f32.mrf.mxu0
    %v250 = vadd.f32 0.0, %v249
    %v251 = vpop.f32.mrf.mxu0
    %v252 = vadd.f32 0.0, %v251
    %253 = vmatmul.bf16.gmra.mxu0 %v176
    %v254 = vpop.f32.mrf.mxu0
    %v255 = vadd.f32 0.0, %v254
    %v256 = vpop.f32.mrf.mxu0
    %v257 = vadd.f32 0.0, %v256
    %258 = vmatmul.bf16.gmra.mxu0 %v179
    %v259 = vpop.f32.mrf.mxu0
    %v260 = vadd.f32 0.0, %v259
    %v261 = vpop.f32.mrf.mxu0
    %v262 = vadd.f32 0.0, %v261
    %263 = vmatmul.bf16.gmra.mxu0 %v182
    %v264 = vpop.f32.mrf.mxu0
    %v265 = vadd.f32 0.0, %v264
    %v266 = vpop.f32.mrf.mxu0
    %v267 = vadd.f32 0.0, %v266
    %268 = vmatmul.bf16.gmra.mxu0 %v185
    %v269 = vpop.f32.mrf.mxu0
    %v270 = vadd.f32 0.0, %v269
    %v271 = vpop.f32.mrf.mxu0
    %v272 = vadd.f32 0.0, %v271
    %273 = vmatmul.bf16.gmra.mxu0 %v188
    %v274 = vpop.f32.mrf.mxu0
    %v275 = vadd.f32 0.0, %v274
    %v276 = vpop.f32.mrf.mxu0
    %v277 = vadd.f32 0.0, %v276
    %278 = vdwg.mxu0
    %v279 = vpack.c.bf16 %v200, %v200
    %v280 = vpack.c.bf16 %v202, %v202
    %v281 = vpack.c.bf16 %v205, %v205
    %v282 = vpack.c.bf16 %v207, %v207
    %v283 = vpack.c.bf16 %v210, %v210
    %v284 = vpack.c.bf16 %v212, %v212
    %v285 = vpack.c.bf16 %v215, %v215
    %v286 = vpack.c.bf16 %v217, %v217
    %v287 = vpack.c.bf16 %v220, %v220
    %v288 = vpack.c.bf16 %v222, %v222
    %v289 = vpack.c.bf16 %v225, %v225
    %v290 = vpack.c.bf16 %v227, %v227
    %v291 = vpack.c.bf16 %v230, %v230
    %v292 = vpack.c.bf16 %v232, %v232
    %v293 = vpack.c.bf16 %v235, %v235
    %v294 = vpack.c.bf16 %v237, %v237
    %v295 = vpack.c.bf16 %v240, %v240
    %v296 = vpack.c.bf16 %v242, %v242
    %v297 = vpack.c.bf16 %v245, %v245
    %v298 = vpack.c.bf16 %v247, %v247
    %v299 = vpack.c.bf16 %v250, %v250
    %v300 = vpack.c.bf16 %v252, %v252
    %v301 = vpack.c.bf16 %v255, %v255
    %v302 = vpack.c.bf16 %v257, %v257
    %v303 = vpack.c.bf16 %v260, %v260
    %v304 = vpack.c.bf16 %v262, %v262
    %v305 = vpack.c.bf16 %v265, %v265
    %v306 = vpack.c.bf16 %v267, %v267
    %v307 = vpack.c.bf16 %v270, %v270
    %v308 = vpack.c.bf16 %v272, %v272
    %v309 = vpack.c.bf16 %v275, %v275
    %v310 = vpack.c.bf16 %v277, %v277
    %311 = vst [vmem:[#allocation2] sm:$0xf] %v279
    %312 = vst [vmem:[#allocation2 + $0x4] sm:$0xf] %v280
    %313 = vst [vmem:[#allocation2 + $0x8] sm:$0xf] %v281
    %314 = vst [vmem:[#allocation2 + $0xc] sm:$0xf] %v282
    %315 = vst [vmem:[#allocation2 + $0x10] sm:$0xf] %v283
    %316 = vst [vmem:[#allocation2 + $0x14] sm:$0xf] %v284
    %317 = vst [vmem:[#allocation2 + $0x18] sm:$0xf] %v285
    %318 = vst [vmem:[#allocation2 + $0x1c] sm:$0xf] %v286
    %319 = vst [vmem:[#allocation2 + $0x20] sm:$0xf] %v287
    %320 = vst [vmem:[#allocation2 + $0x24] sm:$0xf] %v288
    %321 = vst [vmem:[#allocation2 + $0x28] sm:$0xf] %v289
    %322 = vst [vmem:[#allocation2 + $0x2c] sm:$0xf] %v290
    %323 = vst [vmem:[#allocation2 + $0x30] sm:$0xf] %v291
    %324 = vst [vmem:[#allocation2 + $0x34] sm:$0xf] %v292
    %325 = vst [vmem:[#allocation2 + $0x38] sm:$0xf] %v293
    %326 = vst [vmem:[#allocation2 + $0x3c] sm:$0xf] %v294
    %327 = vst [vmem:[#allocation2 + $0x40] sm:$0xf] %v295
    %328 = vst [vmem:[#allocation2 + $0x44] sm:$0xf] %v296
    %329 = vst [vmem:[#allocation2 + $0x48] sm:$0xf] %v297
    %330 = vst [vmem:[#allocation2 + $0x4c] sm:$0xf] %v298
    %331 = vst [vmem:[#allocation2 + $0x50] sm:$0xf] %v299
    %332 = vst [vmem:[#allocation2 + $0x54] sm:$0xf] %v300
    %333 = vst [vmem:[#allocation2 + $0x58] sm:$0xf] %v301
    %334 = vst [vmem:[#allocation2 + $0x5c] sm:$0xf] %v302
    %335 = vst [vmem:[#allocation2 + $0x60] sm:$0xf] %v303
    %336 = vst [vmem:[#allocation2 + $0x64] sm:$0xf] %v304
    %337 = vst [vmem:[#allocation2 + $0x68] sm:$0xf] %v305
    %338 = vst [vmem:[#allocation2 + $0x6c] sm:$0xf] %v306
    %339 = vst [vmem:[#allocation2 + $0x70] sm:$0xf] %v307
    %340 = vst [vmem:[#allocation2 + $0x74] sm:$0xf] %v308
    %341 = vst [vmem:[#allocation2 + $0x78] sm:$0xf] %v309
    %342 = vst [vmem:[#allocation2 + $0x7c] sm:$0xf] %v310
    // Predicated region
    $region10: #{tpu_custom_call.1} parent=1 // pred_check
      _
    $region11: #{tpu_custom_call.1} parent=1 // pred_check_branch
      %344 = sbr.rel (0) target = $region13
    $region12: #{tpu_custom_call.1} parent=1 // pred_region
      %346 = vsyncadd [#allocation3], 0
      %s347 = sshll.u32 [#allocation2], 4
      %s348 = int_to_ptr.vmem [resolvable:$true] %s347
      %s349 = sshll.u32 %s2, 4
      %s350 = int_to_ptr.hbm [resolvable:$true] %s349
      %355 = dma.vmem_to_hbm [thread:$0]  %s348, 2048, %s350, [#allocation3], 64, 64, 4
    $region13: #{tpu_custom_call.1} parent=1 // pred_fallthru
      _
    // Predicated region
    $region14: #{tpu_custom_call.1} parent=1 // pred_check
      _
    $region15: #{tpu_custom_call.1} parent=1 // pred_check_branch
      %357 = sbr.rel (0) target = $region17
    $region16: #{tpu_custom_call.1} parent=1 // pred_region
      %359 = dma.done [#allocation3], 2048
    $region17: #{tpu_custom_call.1} parent=1 // pred_fallthru
      _
    %360 = vsyncpa [#allocation3], 1

</llo_original>
